<compile_context>
chip_gen: v7x
topology: tpu7x:2x2x1
jax: 0.10.0
libtpu: 0.0.40
codegen_flags: <defaults>
</compile_context>

<pallas_src>
import functools

import jax
import jax.numpy as jnp
from jax.experimental import pallas as pl
from jax.experimental.pallas import tpu as pltpu

LANE = 128
BF16_SUBLANE = 16  # bf16 packs 2 rows/sublane -> (16, 128) native tile


def _round_up(v: int, m: int) -> int:
    return ((v + m - 1) // m) * m


def _cdiv(a: int, b: int) -> int:
    return -(-a // b)


def head_kernel(x_ref, w1_ref, b1_ref, w2_ref, b2_ref, o_ref):
    # x_ref : [TB, Hp]  pooled features (f32 or bf16); cast to bf16 in-kernel
    # w1_ref: [Hp, Hp]  bf16 first linear weight (in x out), resident
    # b1_ref: [1, Hp]   f32
    # w2_ref: [Hp, CP]  bf16 output weight, zero-padded to lane-dense CP = 128
    # b2_ref: [1, CP]   f32, zero-padded
    # o_ref : [TB, CP]  bf16 logits (valid classes live in [:, :C])
    x = x_ref[...].astype(jnp.bfloat16)
    h = jnp.dot(x, w1_ref[...], preferred_element_type=jnp.float32)
    # bf16 tanh: h gets re-quantized to bf16 for the second MXU dot anyway.
    h = jnp.tanh((h + b1_ref[...]).astype(jnp.bfloat16))
    logit = jnp.dot(h, w2_ref[...], preferred_element_type=jnp.float32)
    o_ref[...] = (logit + b2_ref[...]).astype(o_ref.dtype)


def prepare_head_params(w1, b1, w2, b2):
    """One-time weight prep: bf16 cast + lane-aligned zero pad.

    w1: [H, H], w2: [H, C] already in [in, out] layout (PyTorch nn.Linear
    weights are [out, in]; transpose before calling).  Padded cols/rows are
    zero, so they contribute nothing to the valid output columns.
    """
    H = w1.shape[0]
    C = w2.shape[1]
    Hp = _round_up(H, LANE)
    CP = _round_up(C, LANE)
    f32, bf16 = jnp.float32, jnp.bfloat16
    w1p = jnp.zeros((Hp, Hp), bf16).at[:H, :H].set(w1.astype(bf16))
    b1p = jnp.zeros((1, Hp), f32).at[0, :H].set(b1.astype(f32))
    w2p = jnp.zeros((Hp, CP), bf16).at[:H, :C].set(w2.astype(bf16))
    b2p = jnp.zeros((1, CP), f32).at[0, :C].set(b2.astype(f32))
    return w1p, b1p, w2p, b2p


def _pick_batch_tile(B: int) -> int:
    if B <= 64:
        # Single tile; block dim == full array dim is always a legal block.
        return B
    # >= 2 tiles so v7x's two TensorCores both get work and DMA/compute
    # pipelining kicks in; cap tiles around 256 rows, keep a multiple of 16
    # (bf16 sublane packing), and balance the last (ragged) tile.
    n_tiles = max(2, _cdiv(B, 256))
    return _round_up(_cdiv(B, n_tiles), BF16_SUBLANE)


@functools.partial(jax.jit, static_argnames=("num_classes",))
def classifier_head(x, w1p, b1p, w2p, b2p, *, num_classes: int = 4):
    """Fused linear -> tanh -> linear head.  x: [B, H] pooled features."""
    B, H = x.shape
    Hp, CP = w1p.shape[0], w2p.shape[1]
    if H != Hp:
        # Only for non-lane-aligned H (not the BERT case).
        x = jnp.pad(x, ((0, 0), (0, Hp - H)))

    TB = _pick_batch_tile(B)
    num_tiles = _cdiv(B, TB)  # last tile may be ragged; its store is masked

    x_item = jnp.dtype(x.dtype).itemsize
    weight_bytes = Hp * Hp * 2 + Hp * CP * 2 + Hp * 4 + CP * 4
    tile_bytes = 2 * (TB * Hp * x_item + TB * CP * 2)  # double-buffered x / out

    # Single-buffer the resident weights only when double-buffering them is
    # VMEM-significant (large H); BERT-sized heads keep the default pipeline.
    single_buffer_weights = (2 * weight_bytes) > (8 << 20)
    w_kwargs = (dict(pipeline_mode=pl.Buffered(buffer_count=1))
                if single_buffer_weights else {})
    resident_weight_bytes = weight_bytes if single_buffer_weights else 2 * weight_bytes

    vmem_bytes = int(1.25 * (resident_weight_bytes + tile_bytes)) + (4 << 20)
    vmem_bytes = min(max(vmem_bytes, 16 << 20), 48 << 20)

    cost = pl.CostEstimate(
        flops=2 * B * Hp * Hp + 2 * B * Hp * CP,
        transcendentals=B * Hp,
        bytes_accessed=B * Hp * x_item + weight_bytes + B * CP * 2,
    )

    out = pl.pallas_call(
        head_kernel,
        out_shape=jax.ShapeDtypeStruct((B, CP), jnp.bfloat16),
        grid=(num_tiles,),
        in_specs=[
            pl.BlockSpec((TB, Hp), lambda i: (i, 0)),              # x: batch-tiled
            pl.BlockSpec((Hp, Hp), lambda i: (0, 0), **w_kwargs),  # w1: resident
            pl.BlockSpec((1, Hp), lambda i: (0, 0), **w_kwargs),   # b1: resident
            pl.BlockSpec((Hp, CP), lambda i: (0, 0), **w_kwargs),  # w2: resident
            pl.BlockSpec((1, CP), lambda i: (0, 0), **w_kwargs),   # b2: resident
        ],
        out_specs=pl.BlockSpec((TB, CP), lambda i: (i, 0)),
        compiler_params=pltpu.CompilerParams(
            dimension_semantics=("parallel",),  # batch tiles independent
            vmem_limit_bytes=vmem_bytes,
        ),
        cost_estimate=cost,
    )(x, w1p, b1p, w2p, b2p)

    # Valid logits only; back to f32 for the caller (tiny [B, C] slice).
    return out[:B, :num_classes].astype(jnp.float32)


def reference_head(x, w1, b1, w2, b2):
    # Pure-JAX reference mirroring the kernel's mixed precision: bf16 operands,
    # f32 MXU accumulation, bf16 pre-activation / hidden, bf16 logit store.
    f32, bf16 = jnp.float32, jnp.bfloat16
    xb = x.astype(bf16).astype(f32)
    w1b = w1.astype(bf16).astype(f32)
    w2b = w2.astype(bf16).astype(f32)
    pre = (xb @ w1b + b1).astype(bf16).astype(f32)
    h = jnp.tanh(pre).astype(bf16).astype(f32)
    return (h @ w2b + b2).astype(bf16).astype(f32)


if __name__ == "__main__":
    B = 8        # batch
    H = 128      # hidden_size (small stand-in for BERT hidden)
    C = 4        # number of classes (nn.Linear(hidden_size, 4))

    key = jax.random.PRNGKey(0)
    kx, kw1, kb1, kw2, kb2 = jax.random.split(key, 5)

    # Deterministic "pooled" features standing in for PLM(...).pooler_output.
    x = jax.random.normal(kx, (B, H), dtype=jnp.float32)

    # PyTorch Linear weight is [out, in]; the kernel uses [in, out] layout.
    w1 = jax.random.normal(kw1, (H, H), dtype=jnp.float32) * 0.05
    b1 = jax.random.normal(kb1, (H,), dtype=jnp.float32) * 0.05
    w2 = jax.random.normal(kw2, (H, C), dtype=jnp.float32) * 0.05
    b2 = jax.random.normal(kb2, (C,), dtype=jnp.float32) * 0.05

    params = prepare_head_params(w1, b1, w2, b2)   # one-time, at "model load"
    logits = jax.block_until_ready(classifier_head(x, *params))

    ref = reference_head(x, w1, b1, w2, b2)
    assert logits.shape == (B, C)
    assert logits.dtype == jnp.float32
    assert jnp.allclose(logits, ref, atol=2e-2, rtol=2e-2), "mismatch vs reference"

    print("KERNEL_OK")
</pallas_src>

<mosaic_0001>
module attributes {stable_mosaic.version = 11 : i64} {
  func.func @head_kernel(%arg0: i32, %arg1: memref<8x128xf32, #tpu.memory_space<vmem>>, %arg2: memref<128x128xbf16, #tpu.memory_space<vmem>>, %arg3: memref<1x128xf32, #tpu.memory_space<vmem>>, %arg4: memref<128x128xbf16, #tpu.memory_space<vmem>>, %arg5: memref<1x128xf32, #tpu.memory_space<vmem>>, %arg6: memref<8x128xbf16, #tpu.memory_space<vmem>>) attributes {dimension_semantics = [#tpu.dimension_semantics<parallel>], iteration_bounds = array<i64: 1>, scalar_prefetch = 0 : i64, scratch_operands = 0 : i64, tpu.core_type = #tpu.core_type<tc>, window_params = [{transform_indices = @transform_0, window_bounds = array<i64: 8, 128>}, {pipeline_mode = #tpu.pipeline_mode<synchronous>, transform_indices = @transform_1, window_bounds = array<i64: 128, 128>}, {pipeline_mode = #tpu.pipeline_mode<synchronous>, transform_indices = @transform_2, window_bounds = array<i64: 1, 128>}, {pipeline_mode = #tpu.pipeline_mode<synchronous>, transform_indices = @transform_3, window_bounds = array<i64: 128, 128>}, {pipeline_mode = #tpu.pipeline_mode<synchronous>, transform_indices = @transform_4, window_bounds = array<i64: 1, 128>}, {transform_indices = @transform_5, window_bounds = array<i64: 8, 128>}]} {
    %c0 = arith.constant 0 : index
    %c0_0 = arith.constant 0 : index
    %0 = vector.load %arg1[%c0, %c0_0] : memref<8x128xf32, #tpu.memory_space<vmem>>, vector<8x128xf32>
    %1 = arith.truncf %0 : vector<8x128xf32> to vector<8x128xbf16>
    %c0_1 = arith.constant 0 : index
    %c0_2 = arith.constant 0 : index
    %2 = vector.load %arg2[%c0_1, %c0_2] : memref<128x128xbf16, #tpu.memory_space<vmem>>, vector<128x128xbf16>
    %cst = arith.constant dense<0.000000e+00> : vector<8x128xf32>
    %3 = tpu.matmul %1, %2, %cst {dimension_numbers = #tpu.dot_dimension_numbers<[1], [0], [0], [1], [0, 0, 1, 1], [], []>} : vector<8x128xbf16>, vector<128x128xbf16>, vector<8x128xf32> -> vector<8x128xf32>
    %c0_3 = arith.constant 0 : index
    %c0_4 = arith.constant 0 : index
    %4 = vector.load %arg3[%c0_3, %c0_4] : memref<1x128xf32, #tpu.memory_space<vmem>>, vector<1x128xf32>
    %5 = vector.broadcast %4 : vector<1x128xf32> to vector<8x128xf32>
    %6 = arith.addf %3, %5 : vector<8x128xf32>
    %7 = arith.truncf %6 : vector<8x128xf32> to vector<8x128xbf16>
    %8 = math.tanh %7 : vector<8x128xbf16>
    %c0_5 = arith.constant 0 : index
    %c0_6 = arith.constant 0 : index
    %9 = vector.load %arg4[%c0_5, %c0_6] : memref<128x128xbf16, #tpu.memory_space<vmem>>, vector<128x128xbf16>
    %cst_7 = arith.constant dense<0.000000e+00> : vector<8x128xf32>
    %10 = tpu.matmul %8, %9, %cst_7 {dimension_numbers = #tpu.dot_dimension_numbers<[1], [0], [0], [1], [0, 0, 1, 1], [], []>} : vector<8x128xbf16>, vector<128x128xbf16>, vector<8x128xf32> -> vector<8x128xf32>
    %c0_8 = arith.constant 0 : index
    %c0_9 = arith.constant 0 : index
    %11 = vector.load %arg5[%c0_8, %c0_9] : memref<1x128xf32, #tpu.memory_space<vmem>>, vector<1x128xf32>
    %12 = vector.broadcast %11 : vector<1x128xf32> to vector<8x128xf32>
    %13 = arith.addf %10, %12 : vector<8x128xf32>
    %14 = arith.truncf %13 : vector<8x128xf32> to vector<8x128xbf16>
    %c0_10 = arith.constant 0 : index
    %c0_11 = arith.constant 0 : index
    %15 = vector.load %arg6[%c0_10, %c0_11] : memref<8x128xbf16, #tpu.memory_space<vmem>>, vector<8x128xbf16>
    tpu.vector_store %arg6[%c0_10, %c0_11], %14 {strides = array<i32>} : memref<8x128xbf16, #tpu.memory_space<vmem>>, vector<8x128xbf16>,
    return
  }
  func.func @transform_0(%arg0: i32) -> (i32, i32) {
    %c0_i32 = arith.constant 0 : i32
    %c0_i32_0 = arith.constant 0 : i32
    return %arg0, %c0_i32 : i32, i32
  }
  func.func @transform_1(%arg0: i32) -> (i32, i32) {
    %c0_i32 = arith.constant 0 : i32
    %c0_i32_0 = arith.constant 0 : i32
    %c0_i32_1 = arith.constant 0 : i32
    return %c0_i32, %c0_i32_0 : i32, i32
  }
  func.func @transform_2(%arg0: i32) -> (i32, i32) {
    %c0_i32 = arith.constant 0 : i32
    %c0_i32_0 = arith.constant 0 : i32
    %c0_i32_1 = arith.constant 0 : i32
    return %c0_i32, %c0_i32_0 : i32, i32
  }
  func.func @transform_3(%arg0: i32) -> (i32, i32) {
    %c0_i32 = arith.constant 0 : i32
    %c0_i32_0 = arith.constant 0 : i32
    %c0_i32_1 = arith.constant 0 : i32
    return %c0_i32, %c0_i32_0 : i32, i32
  }
  func.func @transform_4(%arg0: i32) -> (i32, i32) {
    %c0_i32 = arith.constant 0 : i32
    %c0_i32_0 = arith.constant 0 : i32
    %c0_i32_1 = arith.constant 0 : i32
    return %c0_i32, %c0_i32_0 : i32, i32
  }
  func.func @transform_5(%arg0: i32) -> (i32, i32) {
    %c0_i32 = arith.constant 0 : i32
    %c0_i32_0 = arith.constant 0 : i32
    return %arg0, %c0_i32 : i32, i32
  }
}

</mosaic_0001>

<llo_original>
// kernel: classifier_head.1
$region0: #{classifier_head.1}
  #allocation0 [shape = 'u32[]', space=smem, size = 0x4, offset = 0x4, fixed_abs, tag = 'smem constant byte address 0x4 - core index']
  #allocation1 [shape = 'u32[144,128]{1,0:T(1,128)}', space=vmem, size = 0x12000, scoped, tag = 'internal scratch']
  %s0 = inlined_call_operand.hbm [shape: f32[8,128], index: 0, kind: input, shape index: {}]
  %s1 = inlined_call_operand.hbm [shape: bf16[128,128], index: 1, kind: input, shape index: {}]
  %s2 = inlined_call_operand.vmem [shape: f32[1,128], index: 2, kind: input, shape index: {}]
  %s3 = inlined_call_operand.hbm [shape: bf16[128,128], index: 3, kind: input, shape index: {}]
  %s4 = inlined_call_operand.vmem [shape: f32[1,128], index: 4, kind: input, shape index: {}]
  %s5 = inlined_call_operand.vmem [shape: bf16[8,128], index: 5, kind: output, shape index: {}]
  %s6 = sld [smem:[#allocation0]]
  $region42: #{classifier_head.1} parent=0
    _
  %s8 = ssub.s32 1, %s6
  %s9 = scalar_select 0, %s8, %s6
  $region1: #{classifier_head.1} parent=0
    #allocation2 [shape = 'u8[4096]{0}', space=vmem, size = 0x1000, scoped, tag = 'input window, operand 0, single buffered']
    #allocation3 [shape = 's32[1]{0}', space=sflag, size = 0x4, scoped, tag = 'scoped memory for classifier_head.1']
    #allocation4 [shape = 'u8[32768]{0}', space=vmem, size = 0x8000, scoped, tag = 'input window, operand 1, single buffered']
    #allocation5 [shape = 's32[1]{0}', space=sflag, size = 0x4, scoped, tag = 'scoped memory for classifier_head.1']
    #allocation6 [shape = 'u8[32768]{0}', space=vmem, size = 0x8000, scoped, tag = 'input window, operand 3, single buffered']
    %10 = vsyncpa [#allocation3], 0
    %11 = vsyncpa [#allocation5], 0
    // Predicated region
    $region2: #{classifier_head.1} parent=1 // pred_check
      _
    $region3: #{classifier_head.1} parent=1 // pred_check_branch
      %13 = sbr.rel (0) target = $region5
    $region4: #{classifier_head.1} parent=1 // pred_region
      %s15 = ssub.s32 128, 128
      %16 = vsyncadd [#allocation3], %s15
      %s18 = sshll.u32 [#allocation2], 4
      %s19 = int_to_ptr.vmem [resolvable:$true] %s18
      %21 = dma.hbm_to_vmem [thread:$0]  %s0, 128, %s19, [#allocation3]
    $region5: #{classifier_head.1} parent=1 // pred_fallthru
      _
    // Predicated region
    $region6: #{classifier_head.1} parent=1 // pred_check
      _
    $region7: #{classifier_head.1} parent=1 // pred_check_branch
      %23 = sbr.rel (0) target = $region9
    $region8: #{classifier_head.1} parent=1 // pred_region
      %s25 = ssub.s32 1024, 1024
      %26 = vsyncadd [#allocation5], %s25
      %s27 = sshll.u32 [#allocation4], 4
      %s28 = int_to_ptr.vmem [resolvable:$true] %s27
      %33 = dma.hbm_to_vmem [thread:$0]  %s1, 1024, %s28, [#allocation5], 64, 64, 4
    $region9: #{classifier_head.1} parent=1 // pred_fallthru
      _
    // Predicated region
    $region10: #{classifier_head.1} parent=1 // pred_check
      _
    $region11: #{classifier_head.1} parent=1 // pred_check_branch
      %35 = sbr.rel (0) target = $region13
    $region12: #{classifier_head.1} parent=1 // pred_region
      _
    $region13: #{classifier_head.1} parent=1 // pred_fallthru
      _
    // Predicated region
    $region14: #{classifier_head.1} parent=1 // pred_check
      _
    $region15: #{classifier_head.1} parent=1 // pred_check_branch
      %37 = sbr.rel (0) target = $region17
    $region16: #{classifier_head.1} parent=1 // pred_region
      %s39 = ssub.s32 1024, 1024
      %40 = vsyncadd [#allocation5], %s39
      %s41 = sshll.u32 [#allocation6], 4
      %s42 = int_to_ptr.vmem [resolvable:$true] %s41
      %47 = dma.hbm_to_vmem [thread:$0]  %s3, 1024, %s42, [#allocation5], 64, 64, 4
    $region17: #{classifier_head.1} parent=1 // pred_fallthru
      _
    // Predicated region
    $region18: #{classifier_head.1} parent=1 // pred_check
      _
    $region19: #{classifier_head.1} parent=1 // pred_check_branch
      %49 = sbr.rel (0) target = $region21
    $region20: #{classifier_head.1} parent=1 // pred_region
      _
    $region21: #{classifier_head.1} parent=1 // pred_fallthru
      _
    // Predicated region
    $region22: #{classifier_head.1} parent=1 // pred_check
      _
    $region23: #{classifier_head.1} parent=1 // pred_check_branch
      %51 = sbr.rel (0) target = $region25
    $region24: #{classifier_head.1} parent=1 // pred_region
      %52 = dma.done [#allocation3], 128
    $region25: #{classifier_head.1} parent=1 // pred_fallthru
      _
    // Predicated region
    $region26: #{classifier_head.1} parent=1 // pred_check
      _
    $region27: #{classifier_head.1} parent=1 // pred_check_branch
      %54 = sbr.rel (0) target = $region29
    $region28: #{classifier_head.1} parent=1 // pred_region
      %55 = dma.done [#allocation5], 1024
    $region29: #{classifier_head.1} parent=1 // pred_fallthru
      _
    // Predicated region
    $region30: #{classifier_head.1} parent=1 // pred_check
      _
    $region31: #{classifier_head.1} parent=1 // pred_check_branch
      %57 = sbr.rel (0) target = $region33
    $region32: #{classifier_head.1} parent=1 // pred_region
      %58 = dma.done [#allocation5], 1024
    $region33: #{classifier_head.1} parent=1 // pred_fallthru
      _
    %v60 = vld [vmem:[#allocation2] sm:$0xff]
    %v61 = vpack.c.bf16 %v60, %v60
    %v62 = vld [vmem:[#allocation4] sm:$0xf]
    %v63 = vld [vmem:[#allocation4 + $0x4] sm:$0xf]
    %v64 = vld [vmem:[#allocation4 + $0x8] sm:$0xf]
    %v65 = vld [vmem:[#allocation4 + $0xc] sm:$0xf]
    %v66 = vld [vmem:[#allocation4 + $0x10] sm:$0xf]
    %v67 = vld [vmem:[#allocation4 + $0x14] sm:$0xf]
    %v68 = vld [vmem:[#allocation4 + $0x18] sm:$0xf]
    %v69 = vld [vmem:[#allocation4 + $0x1c] sm:$0xf]
    %v70 = vld [vmem:[#allocation4 + $0x20] sm:$0xf]
    %v71 = vld [vmem:[#allocation4 + $0x24] sm:$0xf]
    %v72 = vld [vmem:[#allocation4 + $0x28] sm:$0xf]
    %v73 = vld [vmem:[#allocation4 + $0x2c] sm:$0xf]
    %v74 = vld [vmem:[#allocation4 + $0x30] sm:$0xf]
    %v75 = vld [vmem:[#allocation4 + $0x34] sm:$0xf]
    %v76 = vld [vmem:[#allocation4 + $0x38] sm:$0xf]
    %v77 = vld [vmem:[#allocation4 + $0x3c] sm:$0xf]
    %v78 = vld [vmem:[%s2] sm:$0x1]
    %v80 = vlaneseq
    %v81 = vshrl.u32 %v80, 7
    %v82 = vsub.s32 0, %v81
    %v83 = vrot.slane %v78, %v82
    %v101 = vunpack.c.l.b16 %v62
    %v102 = vunpack.c.l.b16 %v63
    %v103 = vunpack.c.l.b16 %v64
    %v104 = vunpack.c.l.b16 %v65
    %v105 = vunpack.c.l.b16 %v66
    %v106 = vunpack.c.l.b16 %v67
    %v107 = vunpack.c.l.b16 %v68
    %v108 = vunpack.c.l.b16 %v69
    %v109 = vunpack.c.l.b16 %v70
    %v110 = vunpack.c.l.b16 %v71
    %v111 = vunpack.c.l.b16 %v72
    %v112 = vunpack.c.l.b16 %v73
    %v113 = vunpack.c.l.b16 %v74
    %v114 = vunpack.c.l.b16 %v75
    %v115 = vunpack.c.l.b16 %v76
    %v116 = vunpack.c.l.b16 %v77
    %v117 = vpack.c.b16 %v102, %v101
    %v118 = vpack.c.b16 %v104, %v103
    %v119 = vpack.c.b16 %v106, %v105
    %v120 = vpack.c.b16 %v108, %v107
    %v121 = vpack.c.b16 %v110, %v109
    %v122 = vpack.c.b16 %v112, %v111
    %v123 = vpack.c.b16 %v114, %v113
    %v124 = vpack.c.b16 %v116, %v115
    %133 = vmatprep.subr.bf16.mxu0 0
    %134 = vmatpush1.bf16.msra.mxu0 %v117
    %135 = vmatprep.subr.bf16.mxu0 0
    %136 = vmatpush1.bf16.msra.mxu0 %v118
    %137 = vmatprep.subr.bf16.mxu0 0
    %138 = vmatpush1.bf16.msra.mxu0 %v119
    %139 = vmatprep.subr.bf16.mxu0 0
    %140 = vmatpush1.bf16.msra.mxu0 %v120
    %141 = vmatprep.subr.bf16.mxu0 0
    %142 = vmatpush1.bf16.msra.mxu0 %v121
    %143 = vmatprep.subr.bf16.mxu0 0
    %144 = vmatpush1.bf16.msra.mxu0 %v122
    %145 = vmatprep.subr.bf16.mxu0 0
    %146 = vmatpush1.bf16.msra.mxu0 %v123
    %147 = vmatprep.subr.bf16.mxu0 0
    %148 = vmatpush1.bf16.msra.mxu0 %v124
    %149 = vmatprep.subr.bf16.mxu0 0
    %150 = vmatpush1.bf16.msra.mxu0 0
    %151 = vmatprep.subr.bf16.mxu0 0
    %152 = vmatpush1.bf16.msra.mxu0 0
    %153 = vmatprep.subr.bf16.mxu0 0
    %154 = vmatpush1.bf16.msra.mxu0 0
    %155 = vmatprep.subr.bf16.mxu0 0
    %156 = vmatpush1.bf16.msra.mxu0 0
    %157 = vmatprep.subr.bf16.mxu0 0
    %158 = vmatpush1.bf16.msra.mxu0 0
    %159 = vmatprep.subr.bf16.mxu0 0
    %160 = vmatpush1.bf16.msra.mxu0 0
    %161 = vmatprep.subr.bf16.mxu0 0
    %162 = vmatpush1.bf16.msra.mxu0 0
    %163 = vmatprep.subr.bf16.mxu0 0
    %164 = vmatpush1.bf16.msra.mxu0 0
    %165 = vmatprep.mubr.bf16.mxu0 0
    %166 = vmatmul.mubr.bf16.gmra.mrb[0].mxu0 %v61
    %v167 = vpop.f32.mrb[0].mxu0
    %v168 = vadd.f32 %v83, %v167
    %v169 = vpop.f32.mrb[0].mxu0
    %v170 = vpop.f32.mrb[0].mxu0
    %v171 = vpop.f32.mrb[0].mxu0
    %172 = vdwg.mxu0
    %v173 = vpack.c.bf16 %v168, %v168
    %v174 = vtanh.bf16.pop %v173
    %v175 = vld [vmem:[#allocation6] sm:$0xf]
    %v176 = vld [vmem:[#allocation6 + $0x4] sm:$0xf]
    %v177 = vld [vmem:[#allocation6 + $0x8] sm:$0xf]
    %v178 = vld [vmem:[#allocation6 + $0xc] sm:$0xf]
    %v179 = vld [vmem:[#allocation6 + $0x10] sm:$0xf]
    %v180 = vld [vmem:[#allocation6 + $0x14] sm:$0xf]
    %v181 = vld [vmem:[#allocation6 + $0x18] sm:$0xf]
    %v182 = vld [vmem:[#allocation6 + $0x1c] sm:$0xf]
    %v183 = vld [vmem:[#allocation6 + $0x20] sm:$0xf]
    %v184 = vld [vmem:[#allocation6 + $0x24] sm:$0xf]
    %v185 = vld [vmem:[#allocation6 + $0x28] sm:$0xf]
    %v186 = vld [vmem:[#allocation6 + $0x2c] sm:$0xf]
    %v187 = vld [vmem:[#allocation6 + $0x30] sm:$0xf]
    %v188 = vld [vmem:[#allocation6 + $0x34] sm:$0xf]
    %v189 = vld [vmem:[#allocation6 + $0x38] sm:$0xf]
    %v190 = vld [vmem:[#allocation6 + $0x3c] sm:$0xf]
    %v191 = vld [vmem:[%s4] sm:$0x1]
    %v193 = vlaneseq
    %v194 = vshrl.u32 %v193, 7
    %v195 = vsub.s32 0, %v194
    %v196 = vrot.slane %v191, %v195
    %v214 = vunpack.c.l.b16 %v175
    %v215 = vunpack.c.l.b16 %v176
    %v216 = vunpack.c.l.b16 %v177
    %v217 = vunpack.c.l.b16 %v178
    %v218 = vunpack.c.l.b16 %v179
    %v219 = vunpack.c.l.b16 %v180
    %v220 = vunpack.c.l.b16 %v181
    %v221 = vunpack.c.l.b16 %v182
    %v222 = vunpack.c.l.b16 %v183
    %v223 = vunpack.c.l.b16 %v184
    %v224 = vunpack.c.l.b16 %v185
    %v225 = vunpack.c.l.b16 %v186
    %v226 = vunpack.c.l.b16 %v187
    %v227 = vunpack.c.l.b16 %v188
    %v228 = vunpack.c.l.b16 %v189
    %v229 = vunpack.c.l.b16 %v190
    %v230 = vpack.c.b16 %v215, %v214
    %v231 = vpack.c.b16 %v217, %v216
    %v232 = vpack.c.b16 %v219, %v218
    %v233 = vpack.c.b16 %v221, %v220
    %v234 = vpack.c.b16 %v223, %v222
    %v235 = vpack.c.b16 %v225, %v224
    %v236 = vpack.c.b16 %v227, %v226
    %v237 = vpack.c.b16 %v229, %v228
    %246 = vmatprep.subr.bf16.mxu0 0
    %247 = vmatpush1.bf16.msra.mxu0 %v230
    %248 = vmatprep.subr.bf16.mxu0 0
    %249 = vmatpush1.bf16.msra.mxu0 %v231
    %250 = vmatprep.subr.bf16.mxu0 0
    %251 = vmatpush1.bf16.msra.mxu0 %v232
    %252 = vmatprep.subr.bf16.mxu0 0
    %253 = vmatpush1.bf16.msra.mxu0 %v233
    %254 = vmatprep.subr.bf16.mxu0 0
    %255 = vmatpush1.bf16.msra.mxu0 %v234
    %256 = vmatprep.subr.bf16.mxu0 0
    %257 = vmatpush1.bf16.msra.mxu0 %v235
    %258 = vmatprep.subr.bf16.mxu0 0
    %259 = vmatpush1.bf16.msra.mxu0 %v236
    %260 = vmatprep.subr.bf16.mxu0 0
    %261 = vmatpush1.bf16.msra.mxu0 %v237
    %262 = vmatprep.subr.bf16.mxu0 0
    %263 = vmatpush1.bf16.msra.mxu0 0
    %264 = vmatprep.subr.bf16.mxu0 0
    %265 = vmatpush1.bf16.msra.mxu0 0
    %266 = vmatprep.subr.bf16.mxu0 0
    %267 = vmatpush1.bf16.msra.mxu0 0
    %268 = vmatprep.subr.bf16.mxu0 0
    %269 = vmatpush1.bf16.msra.mxu0 0
    %270 = vmatprep.subr.bf16.mxu0 0
    %271 = vmatpush1.bf16.msra.mxu0 0
    %272 = vmatprep.subr.bf16.mxu0 0
    %273 = vmatpush1.bf16.msra.mxu0 0
    %274 = vmatprep.subr.bf16.mxu0 0
    %275 = vmatpush1.bf16.msra.mxu0 0
    %276 = vmatprep.subr.bf16.mxu0 0
    %277 = vmatpush1.bf16.msra.mxu0 0
    %278 = vmatprep.mubr.bf16.mxu0 0
    %279 = vmatmul.mubr.bf16.gmra.mrb[0].mxu0 %v174
    %v280 = vpop.f32.mrb[0].mxu0
    %v281 = vadd.f32 %v196, %v280
    %v282 = vpop.f32.mrb[0].mxu0
    %v283 = vpop.f32.mrb[0].mxu0
    %v284 = vpop.f32.mrb[0].mxu0
    %285 = vdwg.mxu0
    %v286 = vpack.c.bf16 %v281, %v281
    %287 = vst [vmem:[%s5] sm:$0xf] %v286
    // Predicated region
    $region34: #{classifier_head.1} parent=1 // pred_check
      _
    $region35: #{classifier_head.1} parent=1 // pred_check_branch
      %289 = sbr.rel (0) target = $region37
    $region36: #{classifier_head.1} parent=1 // pred_region
      _
    $region37: #{classifier_head.1} parent=1 // pred_fallthru
      _
    // Predicated region
    $region38: #{classifier_head.1} parent=1 // pred_check
      _
    $region39: #{classifier_head.1} parent=1 // pred_check_branch
      %291 = sbr.rel (0) target = $region41
    $region40: #{classifier_head.1} parent=1 // pred_region
      _
    $region41: #{classifier_head.1} parent=1 // pred_fallthru
      _
    %292 = vsyncpa [#allocation3], 1
    %293 = vsyncpa [#allocation5], 1

</llo_original>
